<compile_context>
chip_gen: v6e
topology: v6e:2x2x1
jax: 0.10.0
libtpu: 0.0.40
codegen_flags: <defaults>
</compile_context>

<pallas_src>
import math

import jax
import jax.numpy as jnp
import numpy as np
from jax.experimental import pallas as pl
from jax.experimental.pallas import tpu as pltpu


def _make_mapnet_kernel(n_packed, block_rows, blocks_per_core, lane, need_row_mask):
    """Builds the kernel closure. All sizes are static Python ints."""
    vo_lanes = lane - 6  # valid + boundary VO lanes per packed row

    def kernel(wa_ref, wv_ref, p_ref, t_ref, o_ref, acc_a, acc_v):
        c = pl.program_id(0)
        i = pl.program_id(1)

        @pl.when(i == 0)
        def _init():
            acc_a[...] = jnp.zeros_like(acc_a)
            acc_v[...] = jnp.zeros_like(acc_v)

        # diff in f32 regardless of the HBM dtype (bf16 inputs upcast here).
        diff = p_ref[...].astype(jnp.float32) - t_ref[...].astype(jnp.float32)
        ad = jnp.abs(diff)                                    # absolute-pose |diff|
        # simple VO: (pred[p+1]-pred[p]) - (targ[p+1]-targ[p]) == diff[p+1]-diff[p],
        # formed from the resident block with a static 6-lane-offset slice.
        dv = jnp.abs(diff[:, 6:] - diff[:, :vo_lanes])

        if need_row_mask:
            # ragged / clamped trailing blocks: zero rows beyond the packed extent.
            gb = c * blocks_per_core + i
            row = gb * block_rows + jax.lax.broadcasted_iota(
                jnp.int32, (block_rows, 1), 0)
            valid = row < n_packed
            ad = jnp.where(valid, ad, 0.0)
            dv = jnp.where(valid, dv, 0.0)

        # Reduce sublanes first (cheap), then one weighted lane reduction per term.
        col_a = jnp.sum(ad, axis=0, keepdims=True)            # (1, lane)
        col_v = jnp.sum(dv, axis=0, keepdims=True)            # (1, lane-6)
        acc_a[...] += jnp.sum(col_a * wa_ref[...], axis=1, keepdims=True)
        acc_v[...] += jnp.sum(col_v * wv_ref[...], axis=1, keepdims=True)

        @pl.when(i == pl.num_programs(1) - 1)
        def _finalize():
            o_ref[...] = acc_a[...] + acc_v[...]

    return kernel


def mapnet_criterion(pred, targ, sax=0.0, saq=0.0, srx=0.0, srq=0.0,
                     block_rows=None, target_block_bytes=4 * 1024 * 1024):
    """MapNetCriterion.forward. pred, targ: (N, T, 6). Returns loss of shape (1,).

    TODO(synk): only the default t_loss_fn = q_loss_fn = nn.L1Loss() (mean reduction)
    is implemented; arbitrary torch loss modules are not translated.
    """
    pred = jnp.asarray(pred)
    targ = jnp.asarray(targ)
    if pred.dtype == jnp.bfloat16 and targ.dtype == jnp.bfloat16:
        dt = jnp.bfloat16                       # keep bf16 in HBM, upcast in-kernel
    else:
        dt = jnp.float32
        pred = pred.astype(dt)
        targ = targ.astype(dt)

    n, t, d = pred.shape
    assert d == 6 and targ.shape == pred.shape and t >= 2

    # ---- pack k sequences per row so the lane axis is an exact multiple of 128 ----
    k = 128 // math.gcd(6 * t, 128)
    lane = k * 6 * t
    n_pad = ((n + k - 1) // k) * k
    p2 = pred.reshape(n, 6 * t)
    t2 = targ.reshape(n, 6 * t)
    if n_pad != n:
        pad = jnp.zeros((n_pad - n, 6 * t), dt)  # zero rows contribute 0 to every sum
        p2 = jnp.concatenate([p2, pad], axis=0)
        t2 = jnp.concatenate([t2, pad], axis=0)
    n_packed = n_pad // k
    p2 = p2.reshape(n_packed, lane)
    t2 = t2.reshape(n_packed, lane)

    # ---- block sizing (padded-layout aware: lane is already a 128 multiple) ----
    dtype_bytes = 2 if dt == jnp.bfloat16 else 4
    row_align = 16 if dt == jnp.bfloat16 else 8
    row_bytes = lane * dtype_bytes
    if block_rows is not None:
        cap = max(row_align, (block_rows // row_align) * row_align)
    else:
        cap = max(row_align,
                  (target_block_bytes // row_bytes) // row_align * row_align)
    if n_packed <= cap:
        bn, nblocks = n_packed, 1               # single full-extent block
    else:
        bn = cap
        nblocks = -(-n_packed // bn)

    ncores = 2 if nblocks >= 2 else 1           # v7x: 2 TCs; harmless on v5e/v6e
    bpc = -(-nblocks // ncores)
    need_row_mask = (ncores * bpc * bn != n_packed)
    last_blk = nblocks - 1

    # ---- per-lane weight rows (exp(-s) / logical-mean denominators folded in) ----
    na = 3.0 * n * t
    nv = 3.0 * n * (t - 1)
    comp_t = np.tile(np.array([1, 1, 1, 0, 0, 0], np.float32), k * t)   # (lane,)
    wa = (jnp.exp(-sax) / na) * comp_t + (jnp.exp(-saq) / na) * (1.0 - comp_t)
    pose_idx = np.arange(k * t - 1)
    vo_valid = np.repeat(((pose_idx % t) != (t - 1)).astype(np.float32), 6)  # (lane-6,)
    comp_v = comp_t[: lane - 6]
    wv = ((jnp.exp(-srx) / nv) * comp_v
          + (jnp.exp(-srq) / nv) * (1.0 - comp_v)) * vo_valid
    wa = jnp.asarray(wa, jnp.float32).reshape(1, lane)
    wv = jnp.asarray(wv, jnp.float32).reshape(1, lane - 6)

    def blk_map(c, i):
        # clamp so duplicated trailing grid steps re-read a valid block (rows masked)
        return (jnp.minimum(c * bpc + i, last_blk), 0)

    kernel = _make_mapnet_kernel(n_packed, bn, bpc, lane, need_row_mask)

    out = pl.pallas_call(
        kernel,
        out_shape=jax.ShapeDtypeStruct((ncores, 1), jnp.float32),
        grid=(ncores, bpc),
        in_specs=[
            pl.BlockSpec((1, lane), lambda c, i: (0, 0)),        # wa (abs weights)
            pl.BlockSpec((1, lane - 6), lambda c, i: (0, 0)),    # wv (VO weights)
            pl.BlockSpec((bn, lane), blk_map),                   # pred rows
            pl.BlockSpec((bn, lane), blk_map),                   # targ rows
        ],
        out_specs=pl.BlockSpec((1, 1), lambda c, i: (c, 0)),
        scratch_shapes=[pltpu.VMEM((1, 1), jnp.float32)] * 2,
        compiler_params=pltpu.CompilerParams(
            dimension_semantics=("parallel", "arbitrary"),
            vmem_limit_bytes=32 * 1024 * 1024),
    )(wa, wv, p2, t2)

    bias = jnp.asarray(sax + saq + srx + srq, jnp.float32)
    return (jnp.sum(out) + bias).reshape(1)


# -----------------------------------------------------------------------------
# Pure-JAX reference mirroring the torch module (L1Loss mean, calc_vos_simple).
# -----------------------------------------------------------------------------
def reference_loss(pred, targ, sax, saq, srx, srq):
    n, t, d = pred.shape
    pa = pred.reshape(-1, d)
    ta = targ.reshape(-1, d)
    abs_loss = (jnp.exp(-sax) * jnp.mean(jnp.abs(pa[:, :3] - ta[:, :3])) + sax
                + jnp.exp(-saq) * jnp.mean(jnp.abs(pa[:, 3:] - ta[:, 3:])) + saq)
    pv = (pred[:, 1:] - pred[:, :-1]).reshape(-1, d)
    tv = (targ[:, 1:] - targ[:, :-1]).reshape(-1, d)
    vo_loss = (jnp.exp(-srx) * jnp.mean(jnp.abs(pv[:, :3] - tv[:, :3])) + srx
               + jnp.exp(-srq) * jnp.mean(jnp.abs(pv[:, 3:] - tv[:, 3:])) + srq)
    return abs_loss + vo_loss


if __name__ == "__main__":
    key = jax.random.PRNGKey(0)
    ks = jax.random.split(key, 8)

    # typical learn_beta / learn_gamma initial values
    sax, saq, srx, srq = 0.0, -3.0, 0.0, -3.0
    D = 6

    # Case 1: small MapNet-like shapes (N=2, T=8) -> k=8 packing, single block.
    N, T = 2, 8
    pred = jax.random.normal(ks[0], (N, T, D), jnp.float32)
    targ = jax.random.normal(ks[1], (N, T, D), jnp.float32)
    loss = jax.block_until_ready(mapnet_criterion(pred, targ, sax, saq, srx, srq))
    ref = reference_loss(pred, targ, sax, saq, srx, srq)
    assert loss.shape == (1,)
    assert jnp.allclose(loss[0], ref, rtol=1e-4, atol=1e-5), (float(loss[0]), float(ref))

    # Case 2: odd T (k=64 packing) and N not a multiple of k (zero padding path).
    N2, T2 = 37, 5
    pred2 = jax.random.normal(ks[2], (N2, T2, D), jnp.float32)
    targ2 = jax.random.normal(ks[3], (N2, T2, D), jnp.float32)
    loss2 = jax.block_until_ready(mapnet_criterion(pred2, targ2, sax, saq, srx, srq))
    ref2 = reference_loss(pred2, targ2, sax, saq, srx, srq)
    assert jnp.allclose(loss2[0], ref2, rtol=1e-4, atol=1e-5), (float(loss2[0]), float(ref2))

    # Case 3: gridded 2-core path with ragged + clamped trailing blocks (row mask).
    N3, T3 = 150, 8
    pred3 = jax.random.normal(ks[4], (N3, T3, D), jnp.float32)
    targ3 = jax.random.normal(ks[5], (N3, T3, D), jnp.float32)
    loss3 = jax.block_until_ready(
        mapnet_criterion(pred3, targ3, sax, saq, srx, srq, block_rows=8))
    ref3 = reference_loss(pred3, targ3, sax, saq, srx, srq)
    assert jnp.allclose(loss3[0], ref3, rtol=1e-4, atol=1e-5), (float(loss3[0]), float(ref3))

    # Case 4: bf16 inputs stay bf16 in HBM; kernel upcasts to f32.
    pred4 = jax.random.normal(ks[6], (4, 8, D), jnp.float32).astype(jnp.bfloat16)
    targ4 = jax.random.normal(ks[7], (4, 8, D), jnp.float32).astype(jnp.bfloat16)
    loss4 = jax.block_until_ready(mapnet_criterion(pred4, targ4, sax, saq, srx, srq))
    ref4 = reference_loss(pred4.astype(jnp.float32), targ4.astype(jnp.float32),
                          sax, saq, srx, srq)
    assert jnp.allclose(loss4[0], ref4, rtol=2e-3, atol=2e-3), (float(loss4[0]), float(ref4))

    print("KERNEL_OK")
</pallas_src>

<mosaic_0001>
module attributes {stable_mosaic.version = 11 : i64} {
  func.func @kernel(%arg0: i32, %arg1: i32, %arg2: memref<1x384xf32, #tpu.memory_space<vmem>>, %arg3: memref<1x378xf32, #tpu.memory_space<vmem>>, %arg4: memref<1x384xf32, #tpu.memory_space<vmem>>, %arg5: memref<1x384xf32, #tpu.memory_space<vmem>>, %arg6: memref<1x1xf32, #tpu.memory_space<vmem>>, %arg7: memref<1x1xf32, #tpu.memory_space<vmem>>, %arg8: memref<1x1xf32, #tpu.memory_space<vmem>>) attributes {dimension_semantics = [#tpu.dimension_semantics<parallel>, #tpu.dimension_semantics<arbitrary>], iteration_bounds = array<i64: 1, 1>, scalar_prefetch = 0 : i64, scratch_operands = 2 : i64, tpu.core_type = #tpu.core_type<tc>, window_params = [{pipeline_mode = #tpu.pipeline_mode<synchronous>, transform_indices = @transform_0, window_bounds = array<i64: 1, 384>}, {pipeline_mode = #tpu.pipeline_mode<synchronous>, transform_indices = @transform_1, window_bounds = array<i64: 1, 378>}, {transform_indices = @transform_2, window_bounds = array<i64: 1, 384>}, {transform_indices = @transform_3, window_bounds = array<i64: 1, 384>}, {transform_indices = @transform_4, window_bounds = array<i64: 1, 1>}]} {
    %c0_i32 = arith.constant 0 : i32
    %0 = arith.cmpi eq, %arg1, %c0_i32 : i32
    %1 = arith.extui %0 : i1 to i32
    %c0_i32_0 = arith.constant 0 : i32
    %2 = arith.cmpi ne, %1, %c0_i32_0 : i32
    scf.if %2 {
      %cst_21 = arith.constant 0.000000e+00 : f32
      %32 = vector.broadcast %cst_21 : f32 to vector<1x1xf32>
      %c0_22 = arith.constant 0 : index
      %c0_23 = arith.constant 0 : index
      %33 = vector.load %arg7[%c0_22, %c0_23] : memref<1x1xf32, #tpu.memory_space<vmem>>, vector<1x1xf32>
      tpu.vector_store %arg7[%c0_22, %c0_23], %32 {strides = array<i32>} : memref<1x1xf32, #tpu.memory_space<vmem>>, vector<1x1xf32>,
      %cst_24 = arith.constant 0.000000e+00 : f32
      %34 = vector.broadcast %cst_24 : f32 to vector<1x1xf32>
      %c0_25 = arith.constant 0 : index
      %c0_26 = arith.constant 0 : index
      %35 = vector.load %arg8[%c0_25, %c0_26] : memref<1x1xf32, #tpu.memory_space<vmem>>, vector<1x1xf32>
      tpu.vector_store %arg8[%c0_25, %c0_26], %34 {strides = array<i32>} : memref<1x1xf32, #tpu.memory_space<vmem>>, vector<1x1xf32>,
    } else {
    }
    %c0 = arith.constant 0 : index
    %c0_1 = arith.constant 0 : index
    %3 = vector.load %arg4[%c0, %c0_1] : memref<1x384xf32, #tpu.memory_space<vmem>>, vector<1x384xf32>
    %c0_2 = arith.constant 0 : index
    %c0_3 = arith.constant 0 : index
    %4 = vector.load %arg5[%c0_2, %c0_3] : memref<1x384xf32, #tpu.memory_space<vmem>>, vector<1x384xf32>
    %5 = arith.subf %3, %4 : vector<1x384xf32>
    %6 = math.absf %5 : vector<1x384xf32>
    %7 = vector.extract_strided_slice %5 {offsets = [0, 6], sizes = [1, 378], strides = [1, 1]} : vector<1x384xf32> to vector<1x378xf32>
    %8 = vector.extract_strided_slice %5 {offsets = [0, 0], sizes = [1, 378], strides = [1, 1]} : vector<1x384xf32> to vector<1x378xf32>
    %9 = arith.subf %7, %8 : vector<1x378xf32>
    %10 = math.absf %9 : vector<1x378xf32>
    %cst = arith.constant dense<0.000000e+00> : vector<384xf32>
    %11 = vector.multi_reduction <add>, %6, %cst [0] : vector<1x384xf32> to vector<384xf32>
    %12 = vector.shape_cast %11 : vector<384xf32> to vector<1x384xf32>
    %cst_4 = arith.constant dense<0.000000e+00> : vector<378xf32>
    %13 = vector.multi_reduction <add>, %10, %cst_4 [0] : vector<1x378xf32> to vector<378xf32>
    %14 = vector.shape_cast %13 : vector<378xf32> to vector<1x378xf32>
    %c0_5 = arith.constant 0 : index
    %c0_6 = arith.constant 0 : index
    %15 = vector.load %arg7[%c0_5, %c0_6] : memref<1x1xf32, #tpu.memory_space<vmem>>, vector<1x1xf32>
    %c0_7 = arith.constant 0 : index
    %c0_8 = arith.constant 0 : index
    %16 = vector.load %arg2[%c0_7, %c0_8] : memref<1x384xf32, #tpu.memory_space<vmem>>, vector<1x384xf32>
    %17 = arith.mulf %12, %16 : vector<1x384xf32>
    %cst_9 = arith.constant dense<0.000000e+00> : vector<1xf32>
    %18 = vector.multi_reduction <add>, %17, %cst_9 [1] : vector<1x384xf32> to vector<1xf32>
    %19 = vector.shape_cast %18 : vector<1xf32> to vector<1x1xf32>
    %20 = arith.addf %15, %19 : vector<1x1xf32>
    %c0_10 = arith.constant 0 : index
    %c0_11 = arith.constant 0 : index
    %21 = vector.load %arg7[%c0_10, %c0_11] : memref<1x1xf32, #tpu.memory_space<vmem>>, vector<1x1xf32>
    tpu.vector_store %arg7[%c0_10, %c0_11], %20 {strides = array<i32>} : memref<1x1xf32, #tpu.memory_space<vmem>>, vector<1x1xf32>,
    %c0_12 = arith.constant 0 : index
    %c0_13 = arith.constant 0 : index
    %22 = vector.load %arg8[%c0_12, %c0_13] : memref<1x1xf32, #tpu.memory_space<vmem>>, vector<1x1xf32>
    %c0_14 = arith.constant 0 : index
    %c0_15 = arith.constant 0 : index
    %23 = vector.load %arg3[%c0_14, %c0_15] : memref<1x378xf32, #tpu.memory_space<vmem>>, vector<1x378xf32>
    %24 = arith.mulf %14, %23 : vector<1x378xf32>
    %cst_16 = arith.constant dense<0.000000e+00> : vector<1xf32>
    %25 = vector.multi_reduction <add>, %24, %cst_16 [1] : vector<1x378xf32> to vector<1xf32>
    %26 = vector.shape_cast %25 : vector<1xf32> to vector<1x1xf32>
    %27 = arith.addf %22, %26 : vector<1x1xf32>
    %c0_17 = arith.constant 0 : index
    %c0_18 = arith.constant 0 : index
    %28 = vector.load %arg8[%c0_17, %c0_18] : memref<1x1xf32, #tpu.memory_space<vmem>>, vector<1x1xf32>
    tpu.vector_store %arg8[%c0_17, %c0_18], %27 {strides = array<i32>} : memref<1x1xf32, #tpu.memory_space<vmem>>, vector<1x1xf32>,
    %c0_i32_19 = arith.constant 0 : i32
    %29 = arith.cmpi eq, %arg1, %c0_i32_19 : i32
    %30 = arith.extui %29 : i1 to i32
    %c0_i32_20 = arith.constant 0 : i32
    %31 = arith.cmpi ne, %30, %c0_i32_20 : i32
    scf.if %31 {
      %c0_21 = arith.constant 0 : index
      %c0_22 = arith.constant 0 : index
      %32 = vector.load %arg7[%c0_21, %c0_22] : memref<1x1xf32, #tpu.memory_space<vmem>>, vector<1x1xf32>
      %c0_23 = arith.constant 0 : index
      %c0_24 = arith.constant 0 : index
      %33 = vector.load %arg8[%c0_23, %c0_24] : memref<1x1xf32, #tpu.memory_space<vmem>>, vector<1x1xf32>
      %34 = arith.addf %32, %33 : vector<1x1xf32>
      %c0_25 = arith.constant 0 : index
      %c0_26 = arith.constant 0 : index
      %35 = vector.load %arg6[%c0_25, %c0_26] : memref<1x1xf32, #tpu.memory_space<vmem>>, vector<1x1xf32>
      tpu.vector_store %arg6[%c0_25, %c0_26], %34 {strides = array<i32>} : memref<1x1xf32, #tpu.memory_space<vmem>>, vector<1x1xf32>,
    } else {
    }
    return
  }
  func.func @transform_0(%arg0: i32, %arg1: i32) -> (i32, i32) {
    %c0_i32 = arith.constant 0 : i32
    %c0_i32_0 = arith.constant 0 : i32
    %c0_i32_1 = arith.constant 0 : i32
    return %c0_i32, %c0_i32_0 : i32, i32
  }
  func.func @transform_1(%arg0: i32, %arg1: i32) -> (i32, i32) {
    %c0_i32 = arith.constant 0 : i32
    %c0_i32_0 = arith.constant 0 : i32
    %c0_i32_1 = arith.constant 0 : i32
    return %c0_i32, %c0_i32_0 : i32, i32
  }
  func.func @transform_2(%arg0: i32, %arg1: i32) -> (i32, i32) {
    %c1_i32 = arith.constant 1 : i32
    %0 = arith.muli %arg0, %c1_i32 : i32
    %1 = arith.addi %0, %arg1 : i32
    %c0_i32 = arith.constant 0 : i32
    %2 = arith.minsi %1, %c0_i32 : i32
    %c0_i32_0 = arith.constant 0 : i32
    %c0_i32_1 = arith.constant 0 : i32
    return %2, %c0_i32_0 : i32, i32
  }
  func.func @transform_3(%arg0: i32, %arg1: i32) -> (i32, i32) {
    %c1_i32 = arith.constant 1 : i32
    %0 = arith.muli %arg0, %c1_i32 : i32
    %1 = arith.addi %0, %arg1 : i32
    %c0_i32 = arith.constant 0 : i32
    %2 = arith.minsi %1, %c0_i32 : i32
    %c0_i32_0 = arith.constant 0 : i32
    %c0_i32_1 = arith.constant 0 : i32
    return %2, %c0_i32_0 : i32, i32
  }
  func.func @transform_4(%arg0: i32, %arg1: i32) -> (i32, i32) {
    %c0_i32 = arith.constant 0 : i32
    %c0_i32_0 = arith.constant 0 : i32
    return %arg0, %c0_i32 : i32, i32
  }
}

</mosaic_0001>

<llo_original>
// kernel: tpu_custom_call.1
$region0: #{tpu_custom_call.1}
  #allocation0 [shape = 'u32[]', space=smem, size = 0x4, offset = 0x4, fixed_abs, tag = 'smem constant byte address 0x4 - core index']
  #allocation1 [shape = 'u32[144,128]{1,0:T(1,128)}', space=vmem, size = 0x12000, scoped, tag = 'internal scratch']
  #allocation2 [shape = 'f32[1,1]{1,0:T(1,128)}', space=vmem, size = 0x200, scoped, tag = 'scratch operand']
  #allocation3 [shape = 'f32[1,1]{1,0:T(1,128)}', space=vmem, size = 0x200, scoped, tag = 'scratch operand']
  %s0 = inlined_call_operand.hbm [shape: f32[1,384], index: 0, kind: input, shape index: {}]
  %s1 = inlined_call_operand.hbm [shape: f32[1,378], index: 1, kind: input, shape index: {}]
  %s2 = inlined_call_operand.vmem [shape: f32[1,384], index: 2, kind: input, shape index: {}]
  %s3 = inlined_call_operand.hbm [shape: f32[1,384], index: 3, kind: input, shape index: {}]
  %s4 = inlined_call_operand.hbm [shape: f32[1,1], index: 4, kind: output, shape index: {}]
  %s5 = sld [smem:[#allocation0]]
  $region46: #{tpu_custom_call.1} parent=0
    _
  %s7 = ssub.s32 1, %s5
  %s8 = scalar_select 0, %s7, %s5
  $region1: #{tpu_custom_call.1} parent=0
    #allocation4 [shape = 'u8[1536]{0}', space=vmem, size = 0x800, scoped, tag = 'input window, operand 0, single buffered']
    #allocation5 [shape = 's32[1]{0}', space=sflag, size = 0x4, scoped, tag = 'scoped memory for tpu_custom_call.1']
    #allocation6 [shape = 's32[1]{0}', space=sflag, size = 0x4, scoped, tag = 'scoped memory for tpu_custom_call.1']
    #allocation7 [shape = 'u8[1536]{0}', space=vmem, size = 0x800, scoped, tag = 'input window, operand 1, single buffered']
    #allocation8 [shape = 's32[1]{0}', space=sflag, size = 0x4, scoped, tag = 'scoped memory for tpu_custom_call.1']
    #allocation9 [shape = 'u8[1536]{0}', space=vmem, size = 0x800, scoped, tag = 'input window, operand 3, single buffered']
    #allocation10 [shape = 'u8[512]{0}', space=vmem, size = 0x400, scoped, tag = 'output window, operand 0, single buffered']
    %9 = vsyncpa [#allocation5], 0
    %10 = vsyncpa [#allocation8], 0
    %11 = vsyncpa [#allocation6], 0
    // Predicated region
    $region2: #{tpu_custom_call.1} parent=1 // pred_check
      _
    $region3: #{tpu_custom_call.1} parent=1 // pred_check_branch
      %13 = sbr.rel (0) target = $region5
    $region4: #{tpu_custom_call.1} parent=1 // pred_region
      %s15 = ssub.s32 48, 48
      %16 = vsyncadd [#allocation5], %s15
      %s18 = sshll.u32 [#allocation4], 4
      %s19 = int_to_ptr.vmem [resolvable:$true] %s18
      %21 = dma.hbm_to_vmem [thread:$0]  %s0, 48, %s19, [#allocation5]
    $region5: #{tpu_custom_call.1} parent=1 // pred_fallthru
      _
    // Predicated region
    $region6: #{tpu_custom_call.1} parent=1 // pred_check
      _
    $region7: #{tpu_custom_call.1} parent=1 // pred_check_branch
      %23 = sbr.rel (0) target = $region9
    $region8: #{tpu_custom_call.1} parent=1 // pred_region
      %s25 = ssub.s32 48, 48
      %26 = vsyncadd [#allocation8], %s25
      %s28 = sshll.u32 [#allocation7], 4
      %s29 = int_to_ptr.vmem [resolvable:$true] %s28
      %31 = dma.hbm_to_vmem [thread:$0]  %s1, 48, %s29, [#allocation8]
    $region9: #{tpu_custom_call.1} parent=1 // pred_fallthru
      _
    // Predicated region
    $region10: #{tpu_custom_call.1} parent=1 // pred_check
      _
    $region11: #{tpu_custom_call.1} parent=1 // pred_check_branch
      %33 = sbr.rel (0) target = $region13
    $region12: #{tpu_custom_call.1} parent=1 // pred_region
      %s34 = sadd.s32 0, 0
      %p35 = scmp.lt.s32.totalorder %s34, 0
      %s36 = scalar_select %p35, %s34, 0
      %p37 = scmp.lt.s32.totalorder %s36, 0
      %s38 = scalar_select %p37, %s36, 0
      %s39 = smul.addr %s38, 3
      %s40 = scalar_lea.vmem %s2, %s39
      %s41 = sadd.s32 0, 0
      %p42 = scmp.lt.s32.totalorder %s41, 0
      %s43 = scalar_select %p42, %s41, 0
    $region13: #{tpu_custom_call.1} parent=1 // pred_fallthru
      _
    // Predicated region
    $region14: #{tpu_custom_call.1} parent=1 // pred_check
      _
    $region15: #{tpu_custom_call.1} parent=1 // pred_check_branch
      %45 = sbr.rel (0) target = $region17
    $region16: #{tpu_custom_call.1} parent=1 // pred_region
      %s46 = sadd.s32 0, 0
      %p47 = scmp.lt.s32.totalorder %s46, 0
      %s48 = scalar_select %p47, %s46, 0
      %s50 = ssub.s32 48, 48
      %51 = vsyncadd [#allocation8], %s50
      %s52 = smul.addr %s48, 3
      %s53 = smul.addr %s52, 16
      %s54 = scalar_lea.hbm %s3, %s53
      %s56 = sshll.u32 [#allocation9], 4
      %s57 = int_to_ptr.vmem [resolvable:$true] %s56
      %59 = dma.hbm_to_vmem [thread:$0]  %s54, 48, %s57, [#allocation8]
    $region17: #{tpu_custom_call.1} parent=1 // pred_fallthru
      _
    // Predicated region
    $region18: #{tpu_custom_call.1} parent=1 // pred_check
      _
    $region19: #{tpu_custom_call.1} parent=1 // pred_check_branch
      %61 = sbr.rel (0) target = $region21
    $region20: #{tpu_custom_call.1} parent=1 // pred_region
      %62 = dma.done [#allocation5], 48
    $region21: #{tpu_custom_call.1} parent=1 // pred_fallthru
      _
    // Predicated region
    $region22: #{tpu_custom_call.1} parent=1 // pred_check
      _
    $region23: #{tpu_custom_call.1} parent=1 // pred_check_branch
      %64 = sbr.rel (0) target = $region25
    $region24: #{tpu_custom_call.1} parent=1 // pred_region
      %65 = dma.done [#allocation8], 48
    $region25: #{tpu_custom_call.1} parent=1 // pred_fallthru
      _
    // Predicated region
    $region26: #{tpu_custom_call.1} parent=1 // pred_check
      _
    $region27: #{tpu_custom_call.1} parent=1 // pred_check_branch
      %67 = sbr.rel (0) target = $region29
    $region28: #{tpu_custom_call.1} parent=1 // pred_region
      %68 = dma.done [#allocation8], 48
    $region29: #{tpu_custom_call.1} parent=1 // pred_fallthru
      _
    %s69 = sadd.s32 0, 0
    %p70 = scmp.lt.s32.totalorder %s69, 0
    %s71 = scalar_select %p70, %s69, 0
    %p72 = scmp.lt.s32.totalorder %s71, 0
    %s73 = scalar_select %p72, %s71, 0
    %s74 = smul.addr %s73, 3
    %s75 = scalar_lea.vmem %s2, %s74
    %s76 = sadd.s32 0, 0
    %p77 = scmp.lt.s32.totalorder %s76, 0
    %s78 = scalar_select %p77, %s76, 0
    %p79 = scmp.lt.s32.totalorder %s78, 0
    %s80 = scalar_select %p79, %s78, 0
    %s81 = smul.addr %s80, 3
    %s82 = scalar_lea.vmem %s2, %s81
    %s83 = sadd.s32 0, 0
    %p84 = scmp.lt.s32.totalorder %s83, 0
    %s85 = scalar_select %p84, %s83, 0
    %s86 = sadd.s32 0, 0
    %p87 = scmp.lt.s32.totalorder %s86, 0
    %s88 = scalar_select %p87, %s86, 0
    %p89 = scmp.eq.s32.totalorder 0, 0
    // Predicated region
    $region30: #{tpu_custom_call.1} parent=1 // pred_check
      %p90 = pneg %p89
    $region31: #{tpu_custom_call.1} parent=1 // pred_check_branch
      %92 = sbr.rel (%p90) target = $region33
    $region32: #{tpu_custom_call.1} parent=1 // pred_region
      %vm93 = vcmask 0
      %94 = vst.msk [vmem:[#allocation2] sm:$0x1] %vm93, 0.0
      %95 = vst.msk [vmem:[#allocation3] sm:$0x1] %vm93, 0.0
    $region33: #{tpu_custom_call.1} parent=1 // pred_fallthru
      _
    %v96 = vld [vmem:[%s82] sm:$0x7]
    %v97 = vld [vmem:[#allocation9] sm:$0x7]
    %v98 = vsub.f32 %v96, %v97
    %v99 = vand.u32 2147483647, %v98
    %101 = vrot.lane.b32.xlu0 %v98, 6
    %v102 = vpop.permute.xlu0 %101
    %v103 = vrot.slane %v102, 7
    %vm104 = vcmask 48128
    %v105 = vsel %vm104, %v103, %v102
    %v107 = vsub.f32 %v98, %v105
    %v108 = vand.u32 2147483647, %v107
    %v109 = vadd.f32 %v99, 0.0
    %v110 = vadd.f32 %v108, 0.0
    %v111 = vld [vmem:[#allocation2] sm:$0x1]
    %v112 = vld [vmem:[#allocation4] sm:$0x7]
    %v113 = vmul.f32 %v109, %v112
    %v115 = vlaneseq
    %v116 = vshrl.u32 %v115, 7
    %v117 = vsub.s32 0, %v116
    %v118 = vrot.slane %v113, %v117
    %v119 = vlaneseq
    %v120 = vshrl.u32 %v119, 7
    %v121 = vsub.s32 1, %v120
    %v122 = vrot.slane %v113, %v121
    %v123 = vlaneseq
    %v124 = vshrl.u32 %v123, 7
    %v125 = vsub.s32 2, %v124
    %v126 = vrot.slane %v113, %v125
    %vm130 = vcmask 1040384
    %v131 = vsel %vm130, %v118, 0.0
    %v132 = vsel %vm130, %v122, 0.0
    %v133 = vadd.f32 %v131, %v132
    %v134 = vsel %vm130, %v126, 0.0
    %v135 = vadd.f32 %v133, %v134
    %136 = vadd.xlane.f32.xlu0 %v135
    %v137 = vpop.xlane.xlu0 %136
    %v138 = vadd.f32 %v111, %v137
    %vm139 = vcmask 0
    %140 = vst.msk [vmem:[#allocation2] sm:$0x1] %vm139, %v138
    %v141 = vld [vmem:[#allocation3] sm:$0x1]
    %v142 = vld [vmem:[#allocation7] sm:$0x7]
    %144 = vrot.lane.b32.xlu0 %v142, 6
    %v145 = vpop.permute.xlu0 %144
    %v146 = vrot.slane %v145, 7
    %v147 = vsel %vm104, %v146, %v145
    %v149 = vmul.f32 %v110, %v147
    %v151 = vlaneseq
    %v152 = vshrl.u32 %v151, 7
    %v153 = vsub.s32 0, %v152
    %v154 = vrot.slane %v149, %v153
    %v155 = vlaneseq
    %v156 = vshrl.u32 %v155, 7
    %v157 = vsub.s32 1, %v156
    %v158 = vrot.slane %v149, %v157
    %v159 = vlaneseq
    %v160 = vshrl.u32 %v159, 7
    %v161 = vsub.s32 2, %v160
    %v162 = vrot.slane %v149, %v161
    %163 = vrot.lane.b32.xlu0 %v154, 122
    %v164 = vpop.permute.xlu0 %163
    %165 = vrot.lane.b32.xlu0 %v158, 122
    %v166 = vpop.permute.xlu0 %165
    %167 = vrot.lane.b32.xlu0 %v162, 122
    %v168 = vpop.permute.xlu0 %167
    %vm169 = vcmask 998400
    %v170 = vsel %vm169, %v164, %v166
    %v171 = vsel %vm169, %v166, %v168
    %v175 = vsel %vm130, %v170, 0.0
    %v176 = vsel %vm130, %v171, 0.0
    %v177 = vadd.f32 %v175, %v176
    %vm178 = vcmask 991232
    %v179 = vsel %vm178, %v168, 0.0
    %v180 = vadd.f32 %v177, %v179
    %181 = vadd.xlane.f32.xlu0 %v180
    %v182 = vpop.xlane.xlu0 %181
    %v183 = vadd.f32 %v141, %v182
    %184 = vst.msk [vmem:[#allocation3] sm:$0x1] %vm139, %v183
    // Predicated region
    $region34: #{tpu_custom_call.1} parent=1 // pred_check
      %p185 = pneg %p89
    $region35: #{tpu_custom_call.1} parent=1 // pred_check_branch
      %187 = sbr.rel (%p185) target = $region37
    $region36: #{tpu_custom_call.1} parent=1 // pred_region
      %v188 = vld [vmem:[#allocation2] sm:$0x1]
      %v189 = vld [vmem:[#allocation3] sm:$0x1]
      %v190 = vadd.f32 %v188, %v189
      %191 = vst.msk [vmem:[#allocation10] sm:$0x1] %vm139, %v190
    $region37: #{tpu_custom_call.1} parent=1 // pred_fallthru
      _
    // Predicated region
    $region38: #{tpu_custom_call.1} parent=1 // pred_check
      _
    $region39: #{tpu_custom_call.1} parent=1 // pred_check_branch
      %193 = sbr.rel (0) target = $region41
    $region40: #{tpu_custom_call.1} parent=1 // pred_region
      %s195 = ssub.s32 16, 16
      %196 = vsyncadd [#allocation6], %s195
      %s198 = sshll.u32 [#allocation10], 4
      %s199 = int_to_ptr.vmem [resolvable:$true] %s198
      %201 = dma.vmem_to_hbm [thread:$0]  %s199, 16, %s4, [#allocation6]
    $region41: #{tpu_custom_call.1} parent=1 // pred_fallthru
      _
    // Predicated region
    $region42: #{tpu_custom_call.1} parent=1 // pred_check
      _
    $region43: #{tpu_custom_call.1} parent=1 // pred_check_branch
      %203 = sbr.rel (0) target = $region45
    $region44: #{tpu_custom_call.1} parent=1 // pred_region
      %204 = dma.done [#allocation6], 16
    $region45: #{tpu_custom_call.1} parent=1 // pred_fallthru
      _
    %205 = vsyncpa [#allocation5], 1
    %206 = vsyncpa [#allocation8], 1
    %207 = vsyncpa [#allocation6], 1

</llo_original>
